<compile_context>
chip_gen: v5e
topology: v5e:2x2
jax: 0.10.0
libtpu: 0.0.40
codegen_flags: <defaults>
</compile_context>

<pallas_src>
import jax
import jax.numpy as jnp
from jax.experimental import pallas as pl
from jax.experimental.pallas import tpu as pltpu


def snl_kernel(x_ref, wmask_ref, bmask_ref, wadd_ref, badd_ref, out_ref):
    # x_ref: (bblk, C, HW)   wmask_ref: (C, 1)   bmask_ref: (1, 1) in SMEM
    # wadd_ref: (P, C)       badd_ref: (1, P)    out_ref: (bblk, C, HW)
    x = x_ref[...]                                    # native dtype, read once
    bblk, c, _ = x.shape

    # 1) conv_mask logits: VPU mul + sublane (C) reduce.  f32 accumulation via
    #    promotion against the f32 weight (x itself stays in its native dtype).
    wm = wmask_ref[...].reshape(1, c, 1)              # (1, C, 1) f32, sublane-major
    logits = jnp.sum(x * wm, axis=1, keepdims=True) + bmask_ref[0, 0]   # (bblk,1,HW) f32

    # 2) softmax over the spatial (lane) axis, f32.  No padding lanes exist in
    #    the array view (block last dim == full HW), so no masking is needed.
    m = jnp.max(logits, axis=2, keepdims=True)        # (bblk, 1, 1)
    e = jnp.exp(logits - m)                           # (bblk, 1, HW) f32
    denom = jnp.sum(e, axis=2, keepdims=True)         # (bblk, 1, 1)

    # 3) context pooling: ctx[b, c] = sum_s x[b, c, s] * e[b, s]
    #    (VPU mul + lane reduce; e stays f32 so the accumulation is all-f32).
    #    Softmax normalisation is applied to the tiny (bblk, C) result.
    ctx = jnp.sum(x * e, axis=2)                      # (bblk, C) f32
    context = ctx / denom.reshape(bblk, 1)            # (bblk, C) f32

    # 4) channel_add_conv as ONE unbatched MXU matmul (no per-step broadcast of
    #    the weight, no bblk tiny batched matmuls): (bblk, C) x (P, C)^T -> (bblk, P).
    add = jax.lax.dot_general(
        context, wadd_ref[...],
        dimension_numbers=(((1,), (1,)), ((), ())),
        preferred_element_type=jnp.float32)           # (bblk, P)
    add = add + badd_ref[...]                         # (1, P) broadcasts over batch

    # 5) out = x + channel_add_term (broadcast over HW; P == C required).
    out_ref[...] = (x + add[:, :, None].astype(x.dtype)).astype(out_ref.dtype)


def _round_up(v, m):
    return -(-v // m) * m


def _choose_batch_block(B, C, HW, itemsize, vmem_budget, target_block_bytes=8 << 20):
    """Batch items per grid step.

    Grows bblk until the x block reaches ~8 MiB (HBM-roofline-sized) while the
    real VMEM footprint — 2-deep pipelined input + output buffers plus the
    in-kernel f32 temporaries, with C padded up to the sublane multiple — fits
    under the chip budget.  Capped at ceil(B/2) so the grid has >= 2 steps and
    v7x's two TensorCores both get work.
    """
    lanes = _round_up(HW, 128)
    sublane_mult = {4: 8, 2: 16, 1: 32}.get(itemsize, 8)
    per_item_native = _round_up(C, sublane_mult) * lanes * itemsize   # VMEM bytes / batch item
    per_item_f32 = _round_up(C, 8) * lanes * 4                        # f32 temporaries / item
    per_item_cost = 4 * per_item_native + 2 * per_item_f32            # 2x(in+out) bufs + temps
    by_target = max(1, target_block_bytes // per_item_native)
    by_budget = max(1, (vmem_budget - (6 << 20)) // per_item_cost)
    bblk = int(min(B, by_target, by_budget))
    if B >= 2:
        bblk = min(bblk, _round_up(B, 2) // 2)        # ceil(B/2): keep grid length >= 2
    return max(1, bblk)


def snl_block2d(x, w_mask, b_mask, w_add, b_add):
    """SNLblock2d forward (pool='att', fusions=['channel_add']).

    x: (B, C, H, W); w_mask: (1, C); b_mask: (1, 1); w_add: (P, C); b_add: (P, 1).
    Returns (B, C, H, W)."""
    B, C, H, W = x.shape
    P = w_add.shape[0]
    assert P == C, (
        "SNLblock2d forward broadcasts the channel_add term onto x, which "
        f"requires planes == inplanes (got P={P}, C={C}).")
    HW = H * W
    itemsize = jnp.dtype(x.dtype).itemsize

    # Metadata-only reshape: no extra HBM pass (no spatial / batch padding).
    x3 = x.reshape(B, C, HW)

    # Chip-aware VMEM budget with headroom for compiler internal scratch:
    # ~48 MiB on v7x (64 MiB physical), ~112 MiB on v5e/v6e (128 MiB physical).
    try:
        info = pltpu.get_tpu_info()
        phys_vmem = int(getattr(info, "vmem_capacity_bytes", 64 << 20))
    except Exception:
        phys_vmem = 64 << 20
    vmem_budget = max(24 << 20, phys_vmem - (16 << 20))

    bblk = _choose_batch_block(B, C, HW, itemsize, vmem_budget)
    grid = (pl.cdiv(B, bblk),)
    # TODO(synk): stages whose single-batch-item (C, HW) block exceeds the VMEM
    # budget would need a flash-style pass tiling HW ("arbitrary" axis) with
    # online-softmax + (C, 1) accumulators; not needed for GCNet-sized stages.
    # TODO(synk): for C < 8 stages, dense sublane packing (reshape to (B*C, HW)
    # rows with segmented in-kernel reductions) would recover the C/8 vreg
    # utilization factor; lower priority than the block-size / pad removal wins.

    out3 = pl.pallas_call(
        snl_kernel,
        out_shape=jax.ShapeDtypeStruct((B, C, HW), x.dtype),
        grid_spec=pltpu.PrefetchScalarGridSpec(
            num_scalar_prefetch=0,
            grid=grid,
            in_specs=[
                pl.BlockSpec((bblk, C, HW), lambda b: (b, 0, 0)),    # x
                pl.BlockSpec((C, 1), lambda b: (0, 0)),              # conv_mask weight (sublane-major)
                pl.BlockSpec(memory_space=pltpu.MemorySpace.SMEM),   # conv_mask bias (scalar)
                pl.BlockSpec((P, C), lambda b: (0, 0)),              # channel_add weight
                pl.BlockSpec((1, P), lambda b: (0, 0)),              # channel_add bias (lane-major)
            ],
            out_specs=pl.BlockSpec((bblk, C, HW), lambda b: (b, 0, 0)),
        ),
        compiler_params=pltpu.CompilerParams(
            dimension_semantics=("parallel",),     # batch-blocks shard across v7x's 2 TCs
            vmem_limit_bytes=int(vmem_budget),
        ),
    )(x3, w_mask.reshape(C, 1), b_mask, w_add, b_add.reshape(1, P))

    return out3.reshape(B, C, H, W)


def snl_reference(x, w_mask, b_mask, w_add, b_add):
    """Pure-JAX reference mirroring the PyTorch forward."""
    B, C, H, W = x.shape
    x3 = x.reshape(B, C, H * W)
    logits = jnp.einsum('c,bcs->bs', w_mask[0], x3) + b_mask[0, 0]
    attn = jax.nn.softmax(logits, axis=-1)
    context = jnp.einsum('bcs,bs->bc', x3, attn)
    add = jnp.einsum('pc,bc->bp', w_add, context) + b_add[:, 0]
    return x + add[:, :, None, None]


def _make_params(key, C, P):
    km, kbm, ka, kba = jax.random.split(key, 4)
    # conv_mask: Conv2d(C, 1, 1) -> weight (1, C) kaiming-normal(fan_in=C), scalar bias.
    w_mask = jax.random.normal(km, (1, C), dtype=jnp.float32) * jnp.sqrt(2.0 / C)
    b_mask = jax.random.uniform(kbm, (1, 1), dtype=jnp.float32,
                                minval=-1.0 / jnp.sqrt(C), maxval=1.0 / jnp.sqrt(C))
    # channel_add_conv: Conv2d(C, P, 1) -> weight (P, C), bias (P, 1).
    # NOTE: reset_parameters() zero-inits this weight; small random values are
    # used so the matmul path is numerically exercised (forward semantics are
    # identical for any weight values).
    w_add = jax.random.normal(ka, (P, C), dtype=jnp.float32) * 0.1
    b_add = jax.random.uniform(kba, (P, 1), dtype=jnp.float32,
                               minval=-1.0 / jnp.sqrt(C), maxval=1.0 / jnp.sqrt(C))
    return w_mask, b_mask, w_add, b_add


if __name__ == "__main__":
    key = jax.random.PRNGKey(0)
    # Main case + a non-128-multiple H*W case with B=3 (exercises the masked
    # tail store and the partial final batch block) + a C >= 8 case.
    cases = [(2, 4, 16, 16), (3, 4, 7, 7), (2, 8, 12, 12)]
    for idx, (B, C, H, W) in enumerate(cases):
        kx, kp, key = jax.random.split(key, 3)
        x = jax.random.normal(kx, (B, C, H, W), dtype=jnp.float32)
        w_mask, b_mask, w_add, b_add = _make_params(kp, C, C)

        out = jax.block_until_ready(snl_block2d(x, w_mask, b_mask, w_add, b_add))
        ref = snl_reference(x, w_mask, b_mask, w_add, b_add)

        assert out.shape == (B, C, H, W)
        assert jnp.allclose(out, ref, atol=1e-4, rtol=1e-4), \
            f"mismatch vs reference for case {idx}: {(B, C, H, W)}"

    # TODO(synk): pool='avg' and fusions containing 'channel_mul' are inactive in
    # the default config and are not implemented in this kernel.
    print("KERNEL_OK")
</pallas_src>

<mosaic_0001>
module attributes {stable_mosaic.version = 11 : i64} {
  func.func @snl_kernel(%arg0: i32, %arg1: memref<1x4x256xf32, #tpu.memory_space<vmem>>, %arg2: memref<4x1xf32, #tpu.memory_space<vmem>>, %arg3: memref<1x1xf32, #tpu.memory_space<smem>>, %arg4: memref<4x4xf32, #tpu.memory_space<vmem>>, %arg5: memref<1x4xf32, #tpu.memory_space<vmem>>, %arg6: memref<1x4x256xf32, #tpu.memory_space<vmem>>) attributes {dimension_semantics = [#tpu.dimension_semantics<parallel>], iteration_bounds = array<i64: 2>, scalar_prefetch = 0 : i64, scratch_operands = 0 : i64, tpu.core_type = #tpu.core_type<tc>, window_params = [{transform_indices = @transform_0, window_bounds = array<i64: 1, 4, 256>}, {pipeline_mode = #tpu.pipeline_mode<synchronous>, transform_indices = @transform_1, window_bounds = array<i64: 4, 1>}, {transform_indices = @transform_2, window_bounds = array<i64: 1, 1>}, {pipeline_mode = #tpu.pipeline_mode<synchronous>, transform_indices = @transform_3, window_bounds = array<i64: 4, 4>}, {pipeline_mode = #tpu.pipeline_mode<synchronous>, transform_indices = @transform_4, window_bounds = array<i64: 1, 4>}, {transform_indices = @transform_5, window_bounds = array<i64: 1, 4, 256>}]} {
    %c0 = arith.constant 0 : index
    %c0_0 = arith.constant 0 : index
    %c0_1 = arith.constant 0 : index
    %0 = vector.load %arg1[%c0, %c0_0, %c0_1] : memref<1x4x256xf32, #tpu.memory_space<vmem>>, vector<1x4x256xf32>
    %c0_2 = arith.constant 0 : index
    %c0_3 = arith.constant 0 : index
    %1 = vector.load %arg2[%c0_2, %c0_3] : memref<4x1xf32, #tpu.memory_space<vmem>>, vector<4x1xf32>
    %2 = vector.shape_cast %1 : vector<4x1xf32> to vector<1x4x1xf32>
    %3 = vector.broadcast %2 : vector<1x4x1xf32> to vector<1x4x256xf32>
    %4 = arith.mulf %0, %3 : vector<1x4x256xf32>
    %cst = arith.constant dense<0.000000e+00> : vector<1x256xf32>
    %5 = vector.multi_reduction <add>, %4, %cst [1] : vector<1x4x256xf32> to vector<1x256xf32>
    %6 = vector.shape_cast %5 : vector<1x256xf32> to vector<1x1x256xf32>
    %c0_4 = arith.constant 0 : index
    %c0_5 = arith.constant 0 : index
    %7 = memref.load %arg3[%c0_4, %c0_5] : memref<1x1xf32, #tpu.memory_space<smem>>
    %8 = vector.broadcast %7 : f32 to vector<1x1x256xf32>
    %9 = arith.addf %6, %8 : vector<1x1x256xf32>
    %cst_6 = arith.constant dense<0xFF800000> : vector<1x1xf32>
    %10 = vector.multi_reduction <maximumf>, %9, %cst_6 [2] : vector<1x1x256xf32> to vector<1x1xf32>
    %11 = vector.shape_cast %10 : vector<1x1xf32> to vector<1x1x1xf32>
    %12 = vector.broadcast %11 : vector<1x1x1xf32> to vector<1x1x256xf32>
    %13 = arith.subf %9, %12 : vector<1x1x256xf32>
    %14 = math.exp %13 : vector<1x1x256xf32>
    %cst_7 = arith.constant dense<0.000000e+00> : vector<1x1xf32>
    %15 = vector.multi_reduction <add>, %14, %cst_7 [2] : vector<1x1x256xf32> to vector<1x1xf32>
    %16 = vector.shape_cast %15 : vector<1x1xf32> to vector<1x1x1xf32>
    %17 = vector.broadcast %14 : vector<1x1x256xf32> to vector<1x4x256xf32>
    %18 = arith.mulf %0, %17 : vector<1x4x256xf32>
    %cst_8 = arith.constant dense<0.000000e+00> : vector<1x4xf32>
    %19 = vector.multi_reduction <add>, %18, %cst_8 [2] : vector<1x4x256xf32> to vector<1x4xf32>
    %20 = vector.shape_cast %16 : vector<1x1x1xf32> to vector<1x1xf32>
    %21 = vector.broadcast %20 : vector<1x1xf32> to vector<1x4xf32>
    %22 = arith.divf %19, %21 : vector<1x4xf32>
    %c0_9 = arith.constant 0 : index
    %c0_10 = arith.constant 0 : index
    %23 = vector.load %arg4[%c0_9, %c0_10] : memref<4x4xf32, #tpu.memory_space<vmem>>, vector<4x4xf32>
    %cst_11 = arith.constant dense<0.000000e+00> : vector<1x4xf32>
    %24 = tpu.matmul %22, %23, %cst_11 {dimension_numbers = #tpu.dot_dimension_numbers<[1], [1], [0], [0], [0, 0, 1, 0], [], []>} : vector<1x4xf32>, vector<4x4xf32>, vector<1x4xf32> -> vector<1x4xf32>
    %c0_12 = arith.constant 0 : index
    %c0_13 = arith.constant 0 : index
    %25 = vector.load %arg5[%c0_12, %c0_13] : memref<1x4xf32, #tpu.memory_space<vmem>>, vector<1x4xf32>
    %26 = arith.addf %24, %25 : vector<1x4xf32>
    %27 = vector.shape_cast %26 : vector<1x4xf32> to vector<1x4x1xf32>
    %28 = vector.broadcast %27 : vector<1x4x1xf32> to vector<1x4x256xf32>
    %29 = arith.addf %0, %28 : vector<1x4x256xf32>
    %c0_14 = arith.constant 0 : index
    %c0_15 = arith.constant 0 : index
    %c0_16 = arith.constant 0 : index
    %30 = vector.load %arg6[%c0_14, %c0_15, %c0_16] : memref<1x4x256xf32, #tpu.memory_space<vmem>>, vector<1x4x256xf32>
    tpu.vector_store %arg6[%c0_14, %c0_15, %c0_16], %29 {strides = array<i32>} : memref<1x4x256xf32, #tpu.memory_space<vmem>>, vector<1x4x256xf32>,
    return
  }
  func.func @transform_0(%arg0: i32) -> (i32, i32, i32) {
    %c0_i32 = arith.constant 0 : i32
    %c0_i32_0 = arith.constant 0 : i32
    %c0_i32_1 = arith.constant 0 : i32
    return %arg0, %c0_i32, %c0_i32_0 : i32, i32, i32
  }
  func.func @transform_1(%arg0: i32) -> (i32, i32) {
    %c0_i32 = arith.constant 0 : i32
    %c0_i32_0 = arith.constant 0 : i32
    %c0_i32_1 = arith.constant 0 : i32
    return %c0_i32, %c0_i32_0 : i32, i32
  }
  func.func @transform_2(%arg0: i32) -> (i32, i32) {
    %c0_i32 = arith.constant 0 : i32
    %c0_i32_0 = arith.constant 0 : i32
    %c0_i32_1 = arith.constant 0 : i32
    return %c0_i32, %c0_i32_0 : i32, i32
  }
  func.func @transform_3(%arg0: i32) -> (i32, i32) {
    %c0_i32 = arith.constant 0 : i32
    %c0_i32_0 = arith.constant 0 : i32
    %c0_i32_1 = arith.constant 0 : i32
    return %c0_i32, %c0_i32_0 : i32, i32
  }
  func.func @transform_4(%arg0: i32) -> (i32, i32) {
    %c0_i32 = arith.constant 0 : i32
    %c0_i32_0 = arith.constant 0 : i32
    %c0_i32_1 = arith.constant 0 : i32
    return %c0_i32, %c0_i32_0 : i32, i32
  }
  func.func @transform_5(%arg0: i32) -> (i32, i32, i32) {
    %c0_i32 = arith.constant 0 : i32
    %c0_i32_0 = arith.constant 0 : i32
    %c0_i32_1 = arith.constant 0 : i32
    return %arg0, %c0_i32, %c0_i32_0 : i32, i32, i32
  }
}

</mosaic_0001>

<llo_original>
// kernel: tpu_custom_call.1
$region0: #{tpu_custom_call.1}
  #allocation0 [shape = 'u32[]', space=smem, size = 0x4, offset = 0x4, fixed_abs, tag = 'smem constant byte address 0x4 - core index']
  #allocation1 [shape = 'u32[72,128]{1,0:T(1,128)}', space=vmem, size = 0x9000, scoped, tag = 'internal scratch']
  #allocation2 [shape = 'f32[1,1]{1,0:T(1,128)S(6)}', space=smem, size = 0x200, scoped, tag = 'scoped memory for tpu_custom_call.1']
  %s0 = inlined_call_operand.hbm [shape: f32[2,4,256], index: 0, kind: input, shape index: {}]
  %s1 = inlined_call_operand.vmem [shape: f32[4,1], index: 1, kind: input, shape index: {}]
  %s2 = inlined_call_operand.<no memory space> [shape: f32[1,1], index: 2, kind: input, shape index: {}]
  %s3 = inlined_call_operand.vmem [shape: f32[4,4], index: 3, kind: input, shape index: {}]
  %s4 = inlined_call_operand.vmem [shape: f32[1,4], index: 4, kind: input, shape index: {}]
  %s5 = inlined_call_operand.hbm [shape: f32[2,4,256], index: 5, kind: output, shape index: {}]
  %s6 = sld [smem:[#allocation0]]
  $region57: #{tpu_custom_call.1} parent=0
    _
  %s8 = ssub.s32 1, %s6
  %s9 = scalar_select 0, %s8, %s6
  %10 = sst [smem:[#allocation2]] %s2
  $region1: #{tpu_custom_call.1} parent=0
    #allocation3 [shape = 'u8[8192]{0}', space=vmem, size = 0x2000, scoped, tag = 'input window, operand 0']
    #allocation4 [shape = 's32[2]{0}', space=sflag, size = 0x8, scoped, tag = 'scoped memory for tpu_custom_call.1']
    #allocation5 [shape = 's32[2]{0}', space=sflag, size = 0x8, scoped, tag = 'scoped memory for tpu_custom_call.1']
    #allocation6 [shape = 'u8[8192]{0}', space=vmem, size = 0x2000, scoped, tag = 'output window, operand 0']
    %11 = vsyncpa [#allocation4], 0
    %s12 = scalar_lea.sflag [#allocation4], 1
    %13 = vsyncpa %s12, 0
    %14 = vsyncpa [#allocation5], 0
    %s15 = scalar_lea.sflag [#allocation5], 1
    %16 = vsyncpa %s15, 0
    loop: start=0, step=1, limit=4
    $region2: #{tpu_custom_call.1} parent=1 // loop_pre_header
      _
    $region3: #{tpu_custom_call.1} parent=1 // loop_header
      %s18 = sphi 0, %s22
      %p19 = scmp.ge.s32.totalorder %s18, 4
      %s28 = sphi 0, %s30
      %s31 = sphi 0, %s28
      %s32 = sphi 0, %s31
      %s48 = sphi 0, %s32
      %s52 = sphi 0, %s52
      %s54 = sphi 0, %s52
      %s55 = sphi 0, %s54
      %s69 = sphi 0, %s55
      %s73 = sphi 0, %s73
      %s75 = sphi 0, %s73
      %s76 = sphi 0, %s75
      %s90 = sphi 0, %s76
      %s94 = sphi 0, %s94
      %s96 = sphi 0, %s94
      %s97 = sphi 0, %s96
      %s111 = sphi 0, %s97
      %s115 = sphi 0, %s115
      %s117 = sphi 0, %s115
      %s118 = sphi 0, %s117
      %s132 = sphi 0, %s118
      %s138 = sphi 0, %s140
      %s141 = sphi 0, %s138
      %s142 = sphi 0, %s141
      %s158 = sphi 0, %s142
    $region4: #{tpu_custom_call.1} parent=1 // loop_header_branch
      %21 = sbr.rel (%p19) target = $region8
    $region5: #{tpu_custom_call.1} parent=1 // loop_body
      %s23 = ssub.s32 %s18, 1
      %s24 = ssub.s32 %s18, 2
      %s25 = sadd.s32 %s18, 1
      %s26 = ssub.s32 %s18, %s25
      %p27 = scmp.eq.s32.totalorder %s26, 0
      %s29 = sadd.s32 %s28, 1
      %s30 = scalar_select %p27, %s28, %s29
      %p33 = pneg %p27
      %p34 = scmp.eq.s32.totalorder %s18, 1
      %p35 = por %p33, %p34
      %p36 = scmp.ne.s32.totalorder %s28, %s31
      %p37 = scmp.eq.s32.totalorder %s18, 0
      %p38 = por %p36, %p37
      %p39 = scmp.ne.s32.totalorder %s28, %s31
      %p40 = scmp.eq.s32.totalorder %s23, 1
      %p41 = por %p39, %p40
      %p42 = scmp.ne.s32.totalorder %s31, %s32
      %p43 = scmp.eq.s32.totalorder %s23, 0
      %p44 = por %p42, %p43
      %p45 = scmp.ne.s32.totalorder %s31, %s32
      %p46 = scmp.eq.s32.totalorder %s24, 1
      %p47 = por %p45, %p46
      %p49 = scmp.ne.s32.totalorder %s32, %s48
      %p50 = scmp.eq.s32.totalorder %s24, 0
      %p51 = por %p49, %p50
      %s53 = sadd.s32 %s52, 1
      %p56 = scmp.eq.s32.totalorder %s18, 1
      %p57 = scmp.ne.s32.totalorder %s52, %s54
      %p58 = scmp.eq.s32.totalorder %s18, 0
      %p59 = por %p57, %p58
      %p60 = scmp.ne.s32.totalorder %s52, %s54
      %p61 = scmp.eq.s32.totalorder %s23, 1
      %p62 = por %p60, %p61
      %p63 = scmp.ne.s32.totalorder %s54, %s55
      %p64 = scmp.eq.s32.totalorder %s23, 0
      %p65 = por %p63, %p64
      %p66 = scmp.ne.s32.totalorder %s54, %s55
      %p67 = scmp.eq.s32.totalorder %s24, 1
      %p68 = por %p66, %p67
      %p70 = scmp.ne.s32.totalorder %s55, %s69
      %p71 = scmp.eq.s32.totalorder %s24, 0
      %p72 = por %p70, %p71
      %s74 = sadd.s32 %s73, 1
      %p77 = scmp.eq.s32.totalorder %s18, 1
      %p78 = scmp.ne.s32.totalorder %s73, %s75
      %p79 = scmp.eq.s32.totalorder %s18, 0
      %p80 = por %p78, %p79
      %p81 = scmp.ne.s32.totalorder %s73, %s75
      %p82 = scmp.eq.s32.totalorder %s23, 1
      %p83 = por %p81, %p82
      %p84 = scmp.ne.s32.totalorder %s75, %s76
      %p85 = scmp.eq.s32.totalorder %s23, 0
      %p86 = por %p84, %p85
      %p87 = scmp.ne.s32.totalorder %s75, %s76
      %p88 = scmp.eq.s32.totalorder %s24, 1
      %p89 = por %p87, %p88
      %p91 = scmp.ne.s32.totalorder %s76, %s90
      %p92 = scmp.eq.s32.totalorder %s24, 0
      %p93 = por %p91, %p92
      %s95 = sadd.s32 %s94, 1
      %p98 = scmp.eq.s32.totalorder %s18, 1
      %p99 = scmp.ne.s32.totalorder %s94, %s96
      %p100 = scmp.eq.s32.totalorder %s18, 0
      %p101 = por %p99, %p100
      %p102 = scmp.ne.s32.totalorder %s94, %s96
      %p103 = scmp.eq.s32.totalorder %s23, 1
      %p104 = por %p102, %p103
      %p105 = scmp.ne.s32.totalorder %s96, %s97
      %p106 = scmp.eq.s32.totalorder %s23, 0
      %p107 = por %p105, %p106
      %p108 = scmp.ne.s32.totalorder %s96, %s97
      %p109 = scmp.eq.s32.totalorder %s24, 1
      %p110 = por %p108, %p109
      %p112 = scmp.ne.s32.totalorder %s97, %s111
      %p113 = scmp.eq.s32.totalorder %s24, 0
      %p114 = por %p112, %p113
      %s116 = sadd.s32 %s115, 1
      %p119 = scmp.eq.s32.totalorder %s18, 1
      %p120 = scmp.ne.s32.totalorder %s115, %s117
      %p121 = scmp.eq.s32.totalorder %s18, 0
      %p122 = por %p120, %p121
      %p123 = scmp.ne.s32.totalorder %s115, %s117
      %p124 = scmp.eq.s32.totalorder %s23, 1
      %p125 = por %p123, %p124
      %p126 = scmp.ne.s32.totalorder %s117, %s118
      %p127 = scmp.eq.s32.totalorder %s23, 0
      %p128 = por %p126, %p127
      %p129 = scmp.ne.s32.totalorder %s117, %s118
      %p130 = scmp.eq.s32.totalorder %s24, 1
      %p131 = por %p129, %p130
      %p133 = scmp.ne.s32.totalorder %s118, %s132
      %p134 = scmp.eq.s32.totalorder %s24, 0
      %p135 = por %p133, %p134
      %s136 = ssub.s32 %s18, %s25
      %p137 = scmp.eq.s32.totalorder %s136, 0
      %s139 = sadd.s32 %s138, 1
      %s140 = scalar_select %p137, %s138, %s139
      %p143 = pneg %p137
      %p144 = scmp.eq.s32.totalorder %s18, 1
      %p145 = por %p143, %p144
      %p146 = scmp.ne.s32.totalorder %s138, %s141
      %p147 = scmp.eq.s32.totalorder %s18, 0
      %p148 = por %p146, %p147
      %p149 = scmp.ne.s32.totalorder %s138, %s141
      %p150 = scmp.eq.s32.totalorder %s23, 1
      %p151 = por %p149, %p150
      %p152 = scmp.ne.s32.totalorder %s141, %s142
      %p153 = scmp.eq.s32.totalorder %s23, 0
      %p154 = por %p152, %p153
      %p155 = scmp.ne.s32.totalorder %s141, %s142
      %p156 = scmp.eq.s32.totalorder %s24, 1
      %p157 = por %p155, %p156
      %p159 = scmp.ne.s32.totalorder %s142, %s158
      %p160 = scmp.eq.s32.totalorder %s24, 0
      %p161 = por %p159, %p160
      %p162 = scmp.le.s32.totalorder 1, %s18
      %p163 = scmp.lt.s32.totalorder %s18, 3
      %p164 = pnand %p162, %p163
      %p165 = pneg %p164
      // Predicated region
      $region9: #{tpu_custom_call.1} parent=5 // pred_check
        _
      $region10: #{tpu_custom_call.1} parent=5 // pred_check_branch
        %167 = sbr.rel (%p164) target = $region12
      $region11: #{tpu_custom_call.1} parent=5 // pred_region
        %s168 = ssub.s32 %s18, 1
        // Predicated region
        $region13: #{tpu_custom_call.1} parent=11 // pred_check
          %p169 = pneg %p65
        $region14: #{tpu_custom_call.1} parent=11 // pred_check_branch
          %171 = sbr.rel (%p169) target = $region16
        $region15: #{tpu_custom_call.1} parent=11 // pred_region
          _
        $region16: #{tpu_custom_call.1} parent=11 // pred_fallthru
          _
        // Predicated region
        $region17: #{tpu_custom_call.1} parent=11 // pred_check
          %p172 = pneg %p86
        $region18: #{tpu_custom_call.1} parent=11 // pred_check_branch
          %174 = sbr.rel (%p172) target = $region20
        $region19: #{tpu_custom_call.1} parent=11 // pred_region
          _
        $region20: #{tpu_custom_call.1} parent=11 // pred_fallthru
          _
        // Predicated region
        $region21: #{tpu_custom_call.1} parent=11 // pred_check
          %p175 = pneg %p107
        $region22: #{tpu_custom_call.1} parent=11 // pred_check_branch
          %177 = sbr.rel (%p175) target = $region24
        $region23: #{tpu_custom_call.1} parent=11 // pred_region
          _
        $region24: #{tpu_custom_call.1} parent=11 // pred_fallthru
          _
        // Predicated region
        $region25: #{tpu_custom_call.1} parent=11 // pred_check
          %p178 = pneg %p128
        $region26: #{tpu_custom_call.1} parent=11 // pred_check_branch
          %180 = sbr.rel (%p178) target = $region28
        $region27: #{tpu_custom_call.1} parent=11 // pred_region
          _
        $region28: #{tpu_custom_call.1} parent=11 // pred_fallthru
          _
      $region12: #{tpu_custom_call.1} parent=5 // pred_fallthru
        _
      %p181 = scmp.lt.s32.totalorder %s18, 2
      // Predicated region
      $region29: #{tpu_custom_call.1} parent=5 // pred_check
        %p182 = pneg %p181
      $region30: #{tpu_custom_call.1} parent=5 // pred_check_branch
        %184 = sbr.rel (%p182) target = $region32
      $region31: #{tpu_custom_call.1} parent=5 // pred_region
        // Predicated region
        $region33: #{tpu_custom_call.1} parent=31 // pred_check
          %p185 = pneg %p38
        $region34: #{tpu_custom_call.1} parent=31 // pred_check_branch
          %187 = sbr.rel (%p185) target = $region36
        $region35: #{tpu_custom_call.1} parent=31 // pred_region
          %s188 = sand.u32 %s28, 1
          %s189 = scalar_lea.sflag [#allocation4], %s188
          %s190 = sand.u32 %s28, 1
          %s191 = smul.addr %s190, 8
          %s192 = scalar_lea.vmem [#allocation3], %s191
          %194 = vsyncadd %s189, 0
          %s195 = smul.addr %s18, 2
          %s196 = smul.addr %s195, 4
          %s197 = scalar_lea.hbm %s0, %s196
          %s199 = sshll.u32 %s197, 4
          %s200 = int_to_ptr.hbm [resolvable:$true] %s199
          %s201 = sshll.u32 %s192, 4
          %s202 = int_to_ptr.vmem [resolvable:$true] %s201
          %204 = dma.hbm_to_vmem [thread:$0]  %s200, 128, %s202, %s189
        $region36: #{tpu_custom_call.1} parent=31 // pred_fallthru
          _
      $region32: #{tpu_custom_call.1} parent=5 // pred_fallthru
        _
      %p205 = scmp.le.s32.totalorder 1, %s18
      %p206 = scmp.lt.s32.totalorder %s18, 3
      %p207 = pnand %p205, %p206
      %p208 = pneg %p207
      // Predicated region
      $region37: #{tpu_custom_call.1} parent=5 // pred_check
        _
      $region38: #{tpu_custom_call.1} parent=5 // pred_check_branch
        %210 = sbr.rel (%p207) target = $region40
      $region39: #{tpu_custom_call.1} parent=5 // pred_region
        %s211 = ssub.s32 %s18, 1
        %s212 = sand.u32 %s31, 1
        %s213 = scalar_lea.sflag [#allocation4], %s212
        %s214 = sand.u32 %s31, 1
        %s215 = smul.addr %s214, 8
        %s216 = scalar_lea.vmem [#allocation3], %s215
        // Predicated region
        $region41: #{tpu_custom_call.1} parent=39 // pred_check
          %p217 = pneg %p44
        $region42: #{tpu_custom_call.1} parent=39 // pred_check_branch
          %219 = sbr.rel (%p217) target = $region44
        $region43: #{tpu_custom_call.1} parent=39 // pred_region
          %221 = dma.done %s213, 128
        $region44: #{tpu_custom_call.1} parent=39 // pred_fallthru
          _
        %s222 = sand.u32 %s31, 1
        %s223 = scalar_lea.sflag [#allocation4], %s222
        %s224 = sand.u32 %s31, 1
        %s225 = smul.addr %s224, 8
        %s226 = scalar_lea.vmem [#allocation3], %s225
        %p227 = pneg %p44
        %p228 = pneg %p41
        %p229 = pneg %p65
        %p230 = pneg %p62
        %p231 = pneg %p86
        %p232 = pneg %p83
        %p233 = pneg %p107
        %p234 = pneg %p104
        %p235 = pneg %p128
        %p236 = pneg %p125
        %p237 = pneg %p154
        %p238 = pneg %p151
        %s239 = sand.u32 %s141, 1
        %s240 = scalar_lea.sflag [#allocation5], %s239
        %s241 = sand.u32 %s141, 1
        %s242 = smul.addr %s241, 8
        %s243 = scalar_lea.vmem [#allocation6], %s242
        %v244 = vld [vmem:[%s216] sm:$0xff]
        %v245 = vld [vmem:[%s1] sm:$0xf]
        %247 = vset.pattern.permute.xlu0 0
        %248 = vperm.xlu0 %247, %v245
        %v249 = vpop.permute.xlu0 %248
        %v251 = vunpack.c.l.s4 839922192
        %v252 = vunpack.c.0.s8 %v251
        %v253 = vperm.slane %v249, %v252
        %v255 = vmul.f32 %v244, %v253
        %257 = vst [vmem:[#allocation1] ss:$2 sm:$0xff] %v255
        %v258 = vld.sshfl [vmem:[#allocation1] sm:$0xff pattern:$0x75316420]
        %v259 = vld.sshfl [vmem:[#allocation1 + $0x8] sm:$0xff pattern:$0x75316420]
        %vm262 = vcmask 1043456
        %v263 = vsel %vm262, %v258, 0.0
        %v264 = vrot.slane %v263, 4
        %v265 = vadd.f32 %v263, %v264
        %v266 = vrot.slane %v265, 2
        %v267 = vadd.f32 %v265, %v266
        %v268 = vrot.slane %v267, 1
        %v269 = vadd.f32 %v267, %v268
        %v270 = vsel %vm262, %v259, 0.0
        %v271 = vrot.slane %v270, 4
        %v272 = vadd.f32 %v270, %v271
        %v273 = vrot.slane %v272, 2
        %v274 = vadd.f32 %v272, %v273
        %v275 = vrot.slane %v274, 1
        %v276 = vadd.f32 %v274, %v275
        %s277 = sld [smem:[#allocation2]]
        %v278 = vstv %s277
        %v279 = vadd.f32 %v269, %v278
        %v280 = vadd.f32 %v276, %v278
        %v281 = vmax.f32 %v279, %v280
        %282 = vmax.xlane.f32.xlu0 %v281
        %v283 = vpop.xlane.xlu0 %282
        %v284 = vsub.f32 %v279, %v283
        %v285 = vsub.f32 %v280, %v283
        %v286 = vmul.f32 %v284, 1.442695
        %v287 = vpow.pop %v286
        %v288 = vmul.f32 %v285, 1.442695
        %v289 = vpow.pop %v288
        %v290 = vadd.f32 %v287, %v289
        %291 = vadd.xlane.f32.xlu0 %v290
        %v292 = vpop.xlane.xlu0 %291
        %v295 = vrot.slane %v289, 4
        %v296 = vsel %vm262, %v287, %v295
        %v298 = vmul.f32 %v244, %v296
        %300 = vst [vmem:[#allocation1] ss:$2 sm:$0xff] %v298
        %v301 = vld.sshfl [vmem:[#allocation1] sm:$0xff pattern:$0x75316420]
        %v302 = vld.sshfl [vmem:[#allocation1 + $0x8] sm:$0xff pattern:$0x75316420]
        %v305 = vsel %vm262, %v301, 0.0
        %v306 = vsel %vm262, %v302, 0.0
        %v307 = vadd.f32 %v305, %v306
        %308 = vadd.xlane.f32.xlu0 %v307
        %v309 = vpop.xlane.xlu0 %308
        %v310 = vrcp.pop %v292
        %v311 = vmul.f32 %v292, %v310
        %v312 = vsub.f32 1.0, %v311
        %v313 = vmul.f32 %v310, %v312
        %v314 = vadd.f32 %v310, %v313
        %vm315 = vweird.f32 %v292
        %vm316 = vweird.f32 %v310
        %vm317 = vmor %vm315, %vm316
        %v318 = vsel %vm317, %v310, %v314
        %v319 = vand.u32 2147483647, %v292
        %vm320 = vcmp.eq.f32.partialorder %v319, 8.507059e+37
        %v321 = vand.u32 %v292, 2147483648
        %v322 = vor.u32 1.1754944e-38, %v321
        %v323 = vsel %vm320, %v322, %v318
        %v324 = vmul.f32 %v309, %v323
        %v325 = vld [vmem:[%s3] sm:$0xf]
        %v326 = vld [vmem:[%s4] sm:$0x1]
        %v328 = vlaneseq
        %v329 = vand.u32 %v328, 127
        %v330 = vperm.slane %v324, %v329
        %vm331 = vcmask 31744
        %v332 = vsel %vm331, %v330, 0
        %v335 = vsel %vm331, %v325, 0
        %337 = vmatpush.xpose.msra.mxu0 0.0
        %338 = vmatpush.xpose.msra.mxu0 0.0
        %339 = vmatpush.xpose.msra.mxu0 0.0
        %340 = vmatpush.xpose.msra.mxu0 0.0
        %341 = vmatpush.xpose.msra.mxu0 0.0
        %342 = vmatpush.xpose.msra.mxu0 0.0
        %343 = vmatpush.xpose.msra.mxu0 0.0
        %344 = vmatpush.xpose.msra.mxu0 0.0
        %345 = vmatpush.xpose.msra.mxu0 0.0
        %346 = vmatpush.xpose.msra.mxu0 0.0
        %347 = vmatpush.xpose.msra.mxu0 0.0
        %348 = vmatpush.xpose.msra.mxu0 0.0
        %349 = vmatpush.xpose.msra.mxu0 0.0
        %350 = vmatpush.xpose.msra.mxu0 0.0
        %351 = vmatpush.xpose.msra.mxu0 0.0
        %352 = vmatpush.xpose.msra.mxu0 %v335
        %353 = vmatmul.f32.gmra.mxu0 %v332
        %v354 = vpop.f32.mrf.mxu0
        %v355 = vadd.f32 %v326, %v354
        %356 = vdwg.mxu0
        %v357 = vperm.slane %v355, 0
        %v358 = vlaneseq
        %v359 = vshrl.u32 %v358, 7
        %361 = vset.pattern.permute.xlu0 %v359
        %362 = vperm.xlu0 %361, %v357
        %v363 = vpop.permute.xlu0 %362
        %v366 = vunpack.c.l.s4 839922192
        %v367 = vunpack.c.0.s8 %v366
        %v368 = vperm.slane %v363, %v367
        %v370 = vadd.f32 %v244, %v368
        %371 = vst [vmem:[%s243] sm:$0xff] %v370
        %s372 = sand.u32 %s141, 1
        %s373 = scalar_lea.sflag [#allocation5], %s372
        %s374 = sand.u32 %s141, 1
        %s375 = smul.addr %s374, 8
        %s376 = scalar_lea.vmem [#allocation6], %s375
        // Predicated region
        $region45: #{tpu_custom_call.1} parent=39 // pred_check
          %p377 = pneg %p151
        $region46: #{tpu_custom_call.1} parent=39 // pred_check_branch
          %379 = sbr.rel (%p377) target = $region48
        $region47: #{tpu_custom_call.1} parent=39 // pred_region
          %381 = vsyncadd %s373, 0
          %s382 = smul.addr %s23, 2
          %s383 = smul.addr %s382, 4
          %s384 = scalar_lea.hbm %s5, %s383
          %s386 = sshll.u32 %s376, 4
          %s387 = int_to_ptr.vmem [resolvable:$true] %s386
          %s388 = sshll.u32 %s384, 4
          %s389 = int_to_ptr.hbm [resolvable:$true] %s388
          %391 = dma.vmem_to_hbm [thread:$0]  %s387, 128, %s389, %s373
        $region48: #{tpu_custom_call.1} parent=39 // pred_fallthru
          _
      $region40: #{tpu_custom_call.1} parent=5 // pred_fallthru
        _
      %p392 = scmp.le.s32.totalorder 2, %s18
      // Predicated region
      $region49: #{tpu_custom_call.1} parent=5 // pred_check
        %p393 = pneg %p392
      $region50: #{tpu_custom_call.1} parent=5 // pred_check_branch
        %395 = sbr.rel (%p393) target = $region52
      $region51: #{tpu_custom_call.1} parent=5 // pred_region
        %s396 = ssub.s32 %s18, 2
        // Predicated region
        $region53: #{tpu_custom_call.1} parent=51 // pred_check
          %p397 = pneg %p157
        $region54: #{tpu_custom_call.1} parent=51 // pred_check_branch
          %399 = sbr.rel (%p397) target = $region56
        $region55: #{tpu_custom_call.1} parent=51 // pred_region
          %s400 = sand.u32 %s142, 1
          %s401 = scalar_lea.sflag [#allocation5], %s400
          %s402 = sand.u32 %s142, 1
          %s403 = smul.addr %s402, 8
          %s404 = scalar_lea.vmem [#allocation6], %s403
          %406 = dma.done %s401, 128
        $region56: #{tpu_custom_call.1} parent=51 // pred_fallthru
          _
      $region52: #{tpu_custom_call.1} parent=5 // pred_fallthru
        _
    $region6: #{tpu_custom_call.1} parent=1 // loop_footer
      %s22 = sadd.s32 1, %s18
    $region7: #{tpu_custom_call.1} parent=1 // loop_footer_branch
      %17 = sbr.rel target = $region3
    $region8: #{tpu_custom_call.1} parent=1 // loop_exit
      _
    %407 = vsyncpa [#allocation4], 1
    %s408 = scalar_lea.sflag [#allocation4], 1
    %409 = vsyncpa %s408, 1
    %410 = vsyncpa [#allocation5], 1
    %s411 = scalar_lea.sflag [#allocation5], 1
    %412 = vsyncpa %s411, 1

</llo_original>
